<compile_context>
chip_gen: v5e
topology: v5e:2x2
jax: 0.10.0
libtpu: 0.0.40
codegen_flags: <defaults>
</compile_context>

<pallas_src>
import functools

import jax
import jax.numpy as jnp
from jax.experimental import pallas as pl
from jax.experimental.pallas import tpu as pltpu

LANE = 128
SUBLANE = 8


def _round_up(x, m):
    return ((x + m - 1) // m) * m


def _tpu_defaults():
    """Per-generation tile / VMEM-cap defaults (unknown chip -> v7x-safe)."""
    try:
        kind = jax.devices()[0].device_kind.lower()
    except Exception:
        kind = ""
    if ("v5" in kind) or ("v6" in kind):
        # 128 MiB physical VMEM: bigger activation tiles, higher cap.
        return {"block_b": 1024, "vmem_cap": 96 * 1024 * 1024}
    # v7x (or unknown): 64 MiB per TC -> tighter cap, ~16-20 MiB headroom.
    return {"block_b": 512, "vmem_cap": 44 * 1024 * 1024}


def _make_fused_mlp_kernel(num_layers):
    """act = x; for each layer i: act = tanh(f32acc(act_bf16 @ W_bf16) + b_f32).

    Ref layout: (x_ref, w0, b0, w1, b1, ..., o_ref).  All feature dims are
    pre-padded to 128 multiples -> lane-dense loads/stores, no masked vst.
    """

    def kernel(*refs):
        x_ref = refs[0]
        wb_refs = refs[1:1 + 2 * num_layers]
        o_ref = refs[1 + 2 * num_layers]

        act = x_ref[...].astype(jnp.float32)
        for i in range(num_layers):
            w_ref = wb_refs[2 * i]
            b_ref = wb_refs[2 * i + 1]
            # bf16 operands -> single-pass MXU; accumulate in f32.
            acc = jnp.dot(act.astype(w_ref.dtype), w_ref[...],
                          preferred_element_type=jnp.float32)
            act = jnp.tanh(acc + b_ref[...])      # f32 bias-add + f32 EUP tanh
        o_ref[...] = act.astype(o_ref.dtype)

    return kernel


def init_mlp_params(key, num_layers, input_size, output_size, mid_size=128,
                    dtype=jnp.float32):
    """PyTorch MLP layer shapes + nn.Linear default init; W as (in, out)."""
    params = []
    for i in range(num_layers):
        if num_layers == 1:
            fan_in, fan_out = input_size, output_size
        elif i == 0:
            fan_in, fan_out = input_size, mid_size
        elif i == num_layers - 1:
            fan_in, fan_out = mid_size, output_size
        else:
            fan_in, fan_out = mid_size, mid_size
        key, wk, bk = jax.random.split(key, 3)
        bound = 1.0 / (fan_in ** 0.5)
        W = jax.random.uniform(wk, (fan_in, fan_out), dtype, -bound, bound)
        b = jax.random.uniform(bk, (fan_out,), dtype, -bound, bound)
        params.append((W, b))
        if num_layers == 1:
            break
    return params


def pad_params(params, weight_dtype=jnp.bfloat16):
    """Zero-pad each (W, b) to 128-lane multiples ONCE, at prep time.

    Weights are stored in bf16 (single-pass MXU, half the VMEM/DMA bytes);
    biases stay f32 since the bias-add and tanh run in f32 in-kernel.
    """
    padded = []
    for (W, b) in params:
        fi, fo = W.shape
        fip, fop = _round_up(fi, LANE), _round_up(fo, LANE)
        Wp = jnp.zeros((fip, fop), weight_dtype).at[:fi, :fo].set(
            W.astype(weight_dtype))
        bp = jnp.zeros((1, fop), jnp.float32).at[0, :fo].set(
            b.astype(jnp.float32))
        padded.append((Wp, bp))
    return tuple(padded)


@functools.lru_cache(maxsize=None)
def _build_mlp_call(num_layers, wb_shapes, wb_dtypes, tb, num_steps,
                    in_pad0, out_padL, out_dtype, vmem_limit,
                    flops, transcendentals, bytes_accessed,
                    single_buffer_weights):
    del wb_dtypes  # only part of the cache key
    wb_specs = []
    for shape in wb_shapes:
        if single_buffer_weights:
            # Grid-invariant (index_map == (0, 0)): one VMEM buffer is enough;
            # double-buffering these only wastes VMEM.
            spec = pl.BlockSpec(shape, lambda i: (0, 0),
                                pipeline_mode=pl.Buffered(1))
        else:
            spec = pl.BlockSpec(shape, lambda i: (0, 0))
        wb_specs.append(spec)

    return pl.pallas_call(
        _make_fused_mlp_kernel(num_layers),
        out_shape=jax.ShapeDtypeStruct((num_steps * tb, out_padL), out_dtype),
        grid=(num_steps,),
        in_specs=[pl.BlockSpec((tb, in_pad0), lambda i: (i, 0))] + wb_specs,
        out_specs=pl.BlockSpec((tb, out_padL), lambda i: (i, 0)),
        compiler_params=pltpu.CompilerParams(
            dimension_semantics=("parallel",),
            vmem_limit_bytes=vmem_limit),
        cost_estimate=pl.CostEstimate(
            flops=flops, transcendentals=transcendentals,
            bytes_accessed=bytes_accessed),
    )


def mlp_forward(x, padded_params, *, output_size, block_b=None):
    B, F = x.shape
    num_layers = len(padded_params)
    in_pads = tuple(int(W.shape[0]) for (W, _) in padded_params)
    out_pads = tuple(int(W.shape[1]) for (W, _) in padded_params)
    in_pad0, out_padL = in_pads[0], out_pads[-1]

    cfg = _tpu_defaults()
    if block_b is None:
        block_b = cfg["block_b"]

    # Aim for >=4 grid steps when the batch allows it (2 TCs on v7x x
    # double-buffer overlap), capped at block_b so huge batches keep large,
    # HBM-roofline-friendly tiles.
    tb = _round_up(min(block_b, max(SUBLANE, pl.cdiv(B, 4))), SUBLANE)
    b_pad = _round_up(B, tb)
    num_steps = b_pad // tb

    # Zero-pad batch rows / input lanes (sliced off again below).
    x_p = jnp.zeros((b_pad, in_pad0), x.dtype).at[:B, :F].set(x)

    flat_wb = []
    for (Wp, bp) in padded_params:
        flat_wb += [Wp, bp]
    wb_shapes = tuple(tuple(int(s) for s in a.shape) for a in flat_wb)
    wb_dtypes = tuple(jnp.dtype(a.dtype).name for a in flat_wb)
    wb_bytes = sum(int(a.size) * jnp.dtype(a.dtype).itemsize for a in flat_wb)

    # Advisory cost estimate for XLA scheduling.
    itemsize = jnp.dtype(x.dtype).itemsize
    flops = int(sum(2 * b_pad * ip * op for ip, op in zip(in_pads, out_pads)))
    transcendentals = int(sum(b_pad * op for op in out_pads))
    bytes_accessed = int(itemsize * b_pad * (in_pad0 + out_padL) + wb_bytes)

    def _vmem_limit(single_buffer):
        act_io = itemsize * 2 * tb * (in_pad0 + out_padL)   # dbl-buffered x/out tiles
        inter = 4 * 2 * tb * max(out_pads)                  # carried f32 activations
        need = act_io + inter + wb_bytes * (1 if single_buffer else 2)
        return int(min(max(2 * need, 8 * 1024 * 1024), cfg["vmem_cap"]))

    def _run(single_buffer):
        call = _build_mlp_call(
            num_layers, wb_shapes, wb_dtypes, int(tb), int(num_steps),
            int(in_pad0), int(out_padL), jnp.dtype(x.dtype),
            _vmem_limit(single_buffer), flops, transcendentals, bytes_accessed,
            single_buffer)
        return jax.block_until_ready(call(x_p, *flat_wb))

    try:
        out_p = _run(True)     # single-buffered resident weights (preferred)
    except Exception:
        out_p = _run(False)    # fallback: default double-buffering

    # Slice away batch padding and the zero-padded output lanes.
    return out_p[:B, :output_size]


if __name__ == "__main__":
    key = jax.random.PRNGKey(0)

    num_layers = 3
    input_size = 32
    mid_size = 128
    output_size = 16
    batch = 8

    pkey, xkey = jax.random.split(key)
    params = init_mlp_params(pkey, num_layers, input_size, output_size, mid_size)
    padded = pad_params(params)                       # bf16 weights, f32 biases
    x = jax.random.normal(xkey, (batch, input_size), jnp.float32)

    out = mlp_forward(x, padded, output_size=output_size)
    out = jax.block_until_ready(out)

    # Reference: plain f32 JAX, same math as the PyTorch forward.
    ref = x
    for (W, b) in params:
        ref = jnp.tanh(ref @ W + b)

    assert out.shape == (batch, output_size)
    max_err = float(jnp.max(jnp.abs(out - ref)))
    # bf16 weights on the MXU -> looser tolerance than pure f32.
    assert jnp.allclose(out, ref, atol=2e-2, rtol=2e-2), max_err

    print("KERNEL_OK")
</pallas_src>

<mosaic_0001>
module attributes {stable_mosaic.version = 11 : i64} {
  func.func @kernel(%arg0: i32, %arg1: memref<8x128xf32, #tpu.memory_space<vmem>>, %arg2: memref<128x128xbf16, #tpu.memory_space<vmem>>, %arg3: memref<1x128xf32, #tpu.memory_space<vmem>>, %arg4: memref<128x128xbf16, #tpu.memory_space<vmem>>, %arg5: memref<1x128xf32, #tpu.memory_space<vmem>>, %arg6: memref<128x128xbf16, #tpu.memory_space<vmem>>, %arg7: memref<1x128xf32, #tpu.memory_space<vmem>>, %arg8: memref<8x128xf32, #tpu.memory_space<vmem>>) attributes {dimension_semantics = [#tpu.dimension_semantics<parallel>], iteration_bounds = array<i64: 1>, scalar_prefetch = 0 : i64, scratch_operands = 0 : i64, tpu.core_type = #tpu.core_type<tc>, window_params = [{transform_indices = @transform_0, window_bounds = array<i64: 8, 128>}, {pipeline_mode = #tpu.pipeline_mode<synchronous>, transform_indices = @transform_1, window_bounds = array<i64: 128, 128>}, {pipeline_mode = #tpu.pipeline_mode<synchronous>, transform_indices = @transform_2, window_bounds = array<i64: 1, 128>}, {pipeline_mode = #tpu.pipeline_mode<synchronous>, transform_indices = @transform_3, window_bounds = array<i64: 128, 128>}, {pipeline_mode = #tpu.pipeline_mode<synchronous>, transform_indices = @transform_4, window_bounds = array<i64: 1, 128>}, {pipeline_mode = #tpu.pipeline_mode<synchronous>, transform_indices = @transform_5, window_bounds = array<i64: 128, 128>}, {pipeline_mode = #tpu.pipeline_mode<synchronous>, transform_indices = @transform_6, window_bounds = array<i64: 1, 128>}, {transform_indices = @transform_7, window_bounds = array<i64: 8, 128>}]} {
    %c0 = arith.constant 0 : index
    %c0_0 = arith.constant 0 : index
    %0 = vector.load %arg1[%c0, %c0_0] : memref<8x128xf32, #tpu.memory_space<vmem>>, vector<8x128xf32>
    %1 = arith.truncf %0 : vector<8x128xf32> to vector<8x128xbf16>
    %c0_1 = arith.constant 0 : index
    %c0_2 = arith.constant 0 : index
    %2 = vector.load %arg2[%c0_1, %c0_2] : memref<128x128xbf16, #tpu.memory_space<vmem>>, vector<128x128xbf16>
    %cst = arith.constant dense<0.000000e+00> : vector<8x128xf32>
    %3 = tpu.matmul %1, %2, %cst {dimension_numbers = #tpu.dot_dimension_numbers<[1], [0], [0], [1], [0, 0, 1, 1], [], []>} : vector<8x128xbf16>, vector<128x128xbf16>, vector<8x128xf32> -> vector<8x128xf32>
    %c0_3 = arith.constant 0 : index
    %c0_4 = arith.constant 0 : index
    %4 = vector.load %arg3[%c0_3, %c0_4] : memref<1x128xf32, #tpu.memory_space<vmem>>, vector<1x128xf32>
    %5 = vector.broadcast %4 : vector<1x128xf32> to vector<8x128xf32>
    %6 = arith.addf %3, %5 : vector<8x128xf32>
    %7 = math.tanh %6 : vector<8x128xf32>
    %8 = arith.truncf %7 : vector<8x128xf32> to vector<8x128xbf16>
    %c0_5 = arith.constant 0 : index
    %c0_6 = arith.constant 0 : index
    %9 = vector.load %arg4[%c0_5, %c0_6] : memref<128x128xbf16, #tpu.memory_space<vmem>>, vector<128x128xbf16>
    %cst_7 = arith.constant dense<0.000000e+00> : vector<8x128xf32>
    %10 = tpu.matmul %8, %9, %cst_7 {dimension_numbers = #tpu.dot_dimension_numbers<[1], [0], [0], [1], [0, 0, 1, 1], [], []>} : vector<8x128xbf16>, vector<128x128xbf16>, vector<8x128xf32> -> vector<8x128xf32>
    %c0_8 = arith.constant 0 : index
    %c0_9 = arith.constant 0 : index
    %11 = vector.load %arg5[%c0_8, %c0_9] : memref<1x128xf32, #tpu.memory_space<vmem>>, vector<1x128xf32>
    %12 = vector.broadcast %11 : vector<1x128xf32> to vector<8x128xf32>
    %13 = arith.addf %10, %12 : vector<8x128xf32>
    %14 = math.tanh %13 : vector<8x128xf32>
    %15 = arith.truncf %14 : vector<8x128xf32> to vector<8x128xbf16>
    %c0_10 = arith.constant 0 : index
    %c0_11 = arith.constant 0 : index
    %16 = vector.load %arg6[%c0_10, %c0_11] : memref<128x128xbf16, #tpu.memory_space<vmem>>, vector<128x128xbf16>
    %cst_12 = arith.constant dense<0.000000e+00> : vector<8x128xf32>
    %17 = tpu.matmul %15, %16, %cst_12 {dimension_numbers = #tpu.dot_dimension_numbers<[1], [0], [0], [1], [0, 0, 1, 1], [], []>} : vector<8x128xbf16>, vector<128x128xbf16>, vector<8x128xf32> -> vector<8x128xf32>
    %c0_13 = arith.constant 0 : index
    %c0_14 = arith.constant 0 : index
    %18 = vector.load %arg7[%c0_13, %c0_14] : memref<1x128xf32, #tpu.memory_space<vmem>>, vector<1x128xf32>
    %19 = vector.broadcast %18 : vector<1x128xf32> to vector<8x128xf32>
    %20 = arith.addf %17, %19 : vector<8x128xf32>
    %21 = math.tanh %20 : vector<8x128xf32>
    %c0_15 = arith.constant 0 : index
    %c0_16 = arith.constant 0 : index
    %22 = vector.load %arg8[%c0_15, %c0_16] : memref<8x128xf32, #tpu.memory_space<vmem>>, vector<8x128xf32>
    tpu.vector_store %arg8[%c0_15, %c0_16], %21 {strides = array<i32>} : memref<8x128xf32, #tpu.memory_space<vmem>>, vector<8x128xf32>,
    return
  }
  func.func @transform_0(%arg0: i32) -> (i32, i32) {
    %c0_i32 = arith.constant 0 : i32
    %c0_i32_0 = arith.constant 0 : i32
    return %arg0, %c0_i32 : i32, i32
  }
  func.func @transform_1(%arg0: i32) -> (i32, i32) {
    %c0_i32 = arith.constant 0 : i32
    %c0_i32_0 = arith.constant 0 : i32
    %c0_i32_1 = arith.constant 0 : i32
    return %c0_i32, %c0_i32_0 : i32, i32
  }
  func.func @transform_2(%arg0: i32) -> (i32, i32) {
    %c0_i32 = arith.constant 0 : i32
    %c0_i32_0 = arith.constant 0 : i32
    %c0_i32_1 = arith.constant 0 : i32
    return %c0_i32, %c0_i32_0 : i32, i32
  }
  func.func @transform_3(%arg0: i32) -> (i32, i32) {
    %c0_i32 = arith.constant 0 : i32
    %c0_i32_0 = arith.constant 0 : i32
    %c0_i32_1 = arith.constant 0 : i32
    return %c0_i32, %c0_i32_0 : i32, i32
  }
  func.func @transform_4(%arg0: i32) -> (i32, i32) {
    %c0_i32 = arith.constant 0 : i32
    %c0_i32_0 = arith.constant 0 : i32
    %c0_i32_1 = arith.constant 0 : i32
    return %c0_i32, %c0_i32_0 : i32, i32
  }
  func.func @transform_5(%arg0: i32) -> (i32, i32) {
    %c0_i32 = arith.constant 0 : i32
    %c0_i32_0 = arith.constant 0 : i32
    %c0_i32_1 = arith.constant 0 : i32
    return %c0_i32, %c0_i32_0 : i32, i32
  }
  func.func @transform_6(%arg0: i32) -> (i32, i32) {
    %c0_i32 = arith.constant 0 : i32
    %c0_i32_0 = arith.constant 0 : i32
    %c0_i32_1 = arith.constant 0 : i32
    return %c0_i32, %c0_i32_0 : i32, i32
  }
  func.func @transform_7(%arg0: i32) -> (i32, i32) {
    %c0_i32 = arith.constant 0 : i32
    %c0_i32_0 = arith.constant 0 : i32
    return %arg0, %c0_i32 : i32, i32
  }
}

module attributes {stable_mosaic.version = 11 : i64} {
  func.func @kernel(%arg0: i32, %arg1: memref<8x128xf32, #tpu.memory_space<vmem>>, %arg2: memref<128x128xbf16, #tpu.memory_space<vmem>>, %arg3: memref<1x128xf32, #tpu.memory_space<vmem>>, %arg4: memref<128x128xbf16, #tpu.memory_space<vmem>>, %arg5: memref<1x128xf32, #tpu.memory_space<vmem>>, %arg6: memref<128x128xbf16, #tpu.memory_space<vmem>>, %arg7: memref<1x128xf32, #tpu.memory_space<vmem>>, %arg8: memref<8x128xf32, #tpu.memory_space<vmem>>) attributes {dimension_semantics = [#tpu.dimension_semantics<parallel>], iteration_bounds = array<i64: 1>, scalar_prefetch = 0 : i64, scratch_operands = 0 : i64, tpu.core_type = #tpu.core_type<tc>, window_params = [{transform_indices = @transform_0, window_bounds = array<i64: 8, 128>}, {pipeline_mode = #tpu.pipeline_mode<synchronous>, transform_indices = @transform_1, window_bounds = array<i64: 128, 128>}, {pipeline_mode = #tpu.pipeline_mode<synchronous>, transform_indices = @transform_2, window_bounds = array<i64: 1, 128>}, {pipeline_mode = #tpu.pipeline_mode<synchronous>, transform_indices = @transform_3, window_bounds = array<i64: 128, 128>}, {pipeline_mode = #tpu.pipeline_mode<synchronous>, transform_indices = @transform_4, window_bounds = array<i64: 1, 128>}, {pipeline_mode = #tpu.pipeline_mode<synchronous>, transform_indices = @transform_5, window_bounds = array<i64: 128, 128>}, {pipeline_mode = #tpu.pipeline_mode<synchronous>, transform_indices = @transform_6, window_bounds = array<i64: 1, 128>}, {transform_indices = @transform_7, window_bounds = array<i64: 8, 128>}]} {
    %c0 = arith.constant 0 : index
    %c0_0 = arith.constant 0 : index
    %0 = vector.load %arg1[%c0, %c0_0] : memref<8x128xf32, #tpu.memory_space<vmem>>, vector<8x128xf32>
    %1 = arith.truncf %0 : vector<8x128xf32> to vector<8x128xbf16>
    %c0_1 = arith.constant 0 : index
    %c0_2 = arith.constant 0 : index
    %2 = vector.load %arg2[%c0_1, %c0_2] : memref<128x128xbf16, #tpu.memory_space<vmem>>, vector<128x128xbf16>
    %cst = arith.constant dense<0.000000e+00> : vector<8x128xf32>
    %3 = tpu.matmul %1, %2, %cst {dimension_numbers = #tpu.dot_dimension_numbers<[1], [0], [0], [1], [0, 0, 1, 1], [], []>} : vector<8x128xbf16>, vector<128x128xbf16>, vector<8x128xf32> -> vector<8x128xf32>
    %c0_3 = arith.constant 0 : index
    %c0_4 = arith.constant 0 : index
    %4 = vector.load %arg3[%c0_3, %c0_4] : memref<1x128xf32, #tpu.memory_space<vmem>>, vector<1x128xf32>
    %5 = vector.broadcast %4 : vector<1x128xf32> to vector<8x128xf32>
    %6 = arith.addf %3, %5 : vector<8x128xf32>
    %7 = math.tanh %6 : vector<8x128xf32>
    %8 = arith.truncf %7 : vector<8x128xf32> to vector<8x128xbf16>
    %c0_5 = arith.constant 0 : index
    %c0_6 = arith.constant 0 : index
    %9 = vector.load %arg4[%c0_5, %c0_6] : memref<128x128xbf16, #tpu.memory_space<vmem>>, vector<128x128xbf16>
    %cst_7 = arith.constant dense<0.000000e+00> : vector<8x128xf32>
    %10 = tpu.matmul %8, %9, %cst_7 {dimension_numbers = #tpu.dot_dimension_numbers<[1], [0], [0], [1], [0, 0, 1, 1], [], []>} : vector<8x128xbf16>, vector<128x128xbf16>, vector<8x128xf32> -> vector<8x128xf32>
    %c0_8 = arith.constant 0 : index
    %c0_9 = arith.constant 0 : index
    %11 = vector.load %arg5[%c0_8, %c0_9] : memref<1x128xf32, #tpu.memory_space<vmem>>, vector<1x128xf32>
    %12 = vector.broadcast %11 : vector<1x128xf32> to vector<8x128xf32>
    %13 = arith.addf %10, %12 : vector<8x128xf32>
    %14 = math.tanh %13 : vector<8x128xf32>
    %15 = arith.truncf %14 : vector<8x128xf32> to vector<8x128xbf16>
    %c0_10 = arith.constant 0 : index
    %c0_11 = arith.constant 0 : index
    %16 = vector.load %arg6[%c0_10, %c0_11] : memref<128x128xbf16, #tpu.memory_space<vmem>>, vector<128x128xbf16>
    %cst_12 = arith.constant dense<0.000000e+00> : vector<8x128xf32>
    %17 = tpu.matmul %15, %16, %cst_12 {dimension_numbers = #tpu.dot_dimension_numbers<[1], [0], [0], [1], [0, 0, 1, 1], [], []>} : vector<8x128xbf16>, vector<128x128xbf16>, vector<8x128xf32> -> vector<8x128xf32>
    %c0_13 = arith.constant 0 : index
    %c0_14 = arith.constant 0 : index
    %18 = vector.load %arg7[%c0_13, %c0_14] : memref<1x128xf32, #tpu.memory_space<vmem>>, vector<1x128xf32>
    %19 = vector.broadcast %18 : vector<1x128xf32> to vector<8x128xf32>
    %20 = arith.addf %17, %19 : vector<8x128xf32>
    %21 = math.tanh %20 : vector<8x128xf32>
    %c0_15 = arith.constant 0 : index
    %c0_16 = arith.constant 0 : index
    %22 = vector.load %arg8[%c0_15, %c0_16] : memref<8x128xf32, #tpu.memory_space<vmem>>, vector<8x128xf32>
    tpu.vector_store %arg8[%c0_15, %c0_16], %21 {strides = array<i32>} : memref<8x128xf32, #tpu.memory_space<vmem>>, vector<8x128xf32>,
    return
  }
  func.func @transform_0(%arg0: i32) -> (i32, i32) {
    %c0_i32 = arith.constant 0 : i32
    %c0_i32_0 = arith.constant 0 : i32
    return %arg0, %c0_i32 : i32, i32
  }
  func.func @transform_1(%arg0: i32) -> (i32, i32) {
    %c0_i32 = arith.constant 0 : i32
    %c0_i32_0 = arith.constant 0 : i32
    %c0_i32_1 = arith.constant 0 : i32
    return %c0_i32, %c0_i32_0 : i32, i32
  }
  func.func @transform_2(%arg0: i32) -> (i32, i32) {
    %c0_i32 = arith.constant 0 : i32
    %c0_i32_0 = arith.constant 0 : i32
    %c0_i32_1 = arith.constant 0 : i32
    return %c0_i32, %c0_i32_0 : i32, i32
  }
  func.func @transform_3(%arg0: i32) -> (i32, i32) {
    %c0_i32 = arith.constant 0 : i32
    %c0_i32_0 = arith.constant 0 : i32
    %c0_i32_1 = arith.constant 0 : i32
    return %c0_i32, %c0_i32_0 : i32, i32
  }
  func.func @transform_4(%arg0: i32) -> (i32, i32) {
    %c0_i32 = arith.constant 0 : i32
    %c0_i32_0 = arith.constant 0 : i32
    %c0_i32_1 = arith.constant 0 : i32
    return %c0_i32, %c0_i32_0 : i32, i32
  }
  func.func @transform_5(%arg0: i32) -> (i32, i32) {
    %c0_i32 = arith.constant 0 : i32
    %c0_i32_0 = arith.constant 0 : i32
    %c0_i32_1 = arith.constant 0 : i32
    return %c0_i32, %c0_i32_0 : i32, i32
  }
  func.func @transform_6(%arg0: i32) -> (i32, i32) {
    %c0_i32 = arith.constant 0 : i32
    %c0_i32_0 = arith.constant 0 : i32
    %c0_i32_1 = arith.constant 0 : i32
    return %c0_i32, %c0_i32_0 : i32, i32
  }
  func.func @transform_7(%arg0: i32) -> (i32, i32) {
    %c0_i32 = arith.constant 0 : i32
    %c0_i32_0 = arith.constant 0 : i32
    return %arg0, %c0_i32 : i32, i32
  }
}

</mosaic_0001>

<llo_original>
// kernel: tpu_custom_call.1
$region0: #{tpu_custom_call.1}
  #allocation0 [shape = 'u32[]', space=smem, size = 0x4, offset = 0x4, fixed_abs, tag = 'smem constant byte address 0x4 - core index']
  #allocation1 [shape = 'u32[72,128]{1,0:T(1,128)}', space=vmem, size = 0x9000, scoped, tag = 'internal scratch']
  %s0 = inlined_call_operand.hbm [shape: f32[8,128], index: 0, kind: input, shape index: {}]
  %s1 = inlined_call_operand.hbm [shape: bf16[128,128], index: 1, kind: input, shape index: {}]
  %s2 = inlined_call_operand.vmem [shape: f32[1,128], index: 2, kind: input, shape index: {}]
  %s3 = inlined_call_operand.hbm [shape: bf16[128,128], index: 3, kind: input, shape index: {}]
  %s4 = inlined_call_operand.vmem [shape: f32[1,128], index: 4, kind: input, shape index: {}]
  %s5 = inlined_call_operand.hbm [shape: bf16[128,128], index: 5, kind: input, shape index: {}]
  %s6 = inlined_call_operand.vmem [shape: f32[1,128], index: 6, kind: input, shape index: {}]
  %s7 = inlined_call_operand.hbm [shape: f32[8,128], index: 7, kind: output, shape index: {}]
  %s8 = sld [smem:[#allocation0]]
  $region54: #{tpu_custom_call.1} parent=0
    _
  %s10 = ssub.s32 1, %s8
  %s11 = scalar_select 0, %s10, %s8
  $region1: #{tpu_custom_call.1} parent=0
    #allocation2 [shape = 'u8[4096]{0}', space=vmem, size = 0x1000, scoped, tag = 'input window, operand 0, single buffered']
    #allocation3 [shape = 's32[1]{0}', space=sflag, size = 0x4, scoped, tag = 'scoped memory for tpu_custom_call.1']
    #allocation4 [shape = 's32[1]{0}', space=sflag, size = 0x4, scoped, tag = 'scoped memory for tpu_custom_call.1']
    #allocation5 [shape = 'u8[32768]{0}', space=vmem, size = 0x8000, scoped, tag = 'input window, operand 1, single buffered']
    #allocation6 [shape = 's32[1]{0}', space=sflag, size = 0x4, scoped, tag = 'scoped memory for tpu_custom_call.1']
    #allocation7 [shape = 'u8[32768]{0}', space=vmem, size = 0x8000, scoped, tag = 'input window, operand 3, single buffered']
    #allocation8 [shape = 'u8[32768]{0}', space=vmem, size = 0x8000, scoped, tag = 'input window, operand 5, single buffered']
    #allocation9 [shape = 's32[1]{0}', space=sflag, size = 0x4, scoped, tag = 'scoped memory for tpu_custom_call.1']
    #allocation10 [shape = 'u8[4096]{0}', space=vmem, size = 0x1000, scoped, tag = 'output window, operand 0, single buffered']
    %12 = vsyncpa [#allocation3], 0
    %13 = vsyncpa [#allocation6], 0
    %14 = vsyncpa [#allocation9], 0
    %15 = vsyncpa [#allocation4], 0
    // Predicated region
    $region2: #{tpu_custom_call.1} parent=1 // pred_check
      _
    $region3: #{tpu_custom_call.1} parent=1 // pred_check_branch
      %17 = sbr.rel (0) target = $region5
    $region4: #{tpu_custom_call.1} parent=1 // pred_region
      %19 = vsyncadd [#allocation3], 0
      %s21 = sshll.u32 %s0, 4
      %s22 = int_to_ptr.hbm [resolvable:$true] %s21
      %s23 = sshll.u32 [#allocation2], 4
      %s24 = int_to_ptr.vmem [resolvable:$true] %s23
      %26 = dma.hbm_to_vmem [thread:$0]  %s22, 128, %s24, [#allocation3]
    $region5: #{tpu_custom_call.1} parent=1 // pred_fallthru
      _
    // Predicated region
    $region6: #{tpu_custom_call.1} parent=1 // pred_check
      _
    $region7: #{tpu_custom_call.1} parent=1 // pred_check_branch
      %28 = sbr.rel (0) target = $region9
    $region8: #{tpu_custom_call.1} parent=1 // pred_region
      %30 = vsyncadd [#allocation6], 0
      %s31 = sshll.u32 %s1, 4
      %s32 = int_to_ptr.hbm [resolvable:$true] %s31
      %s33 = sshll.u32 [#allocation5], 4
      %s34 = int_to_ptr.vmem [resolvable:$true] %s33
      %39 = dma.hbm_to_vmem [thread:$0]  %s32, 1024, %s34, [#allocation6], 64, 64, 4
    $region9: #{tpu_custom_call.1} parent=1 // pred_fallthru
      _
    // Predicated region
    $region10: #{tpu_custom_call.1} parent=1 // pred_check
      _
    $region11: #{tpu_custom_call.1} parent=1 // pred_check_branch
      %41 = sbr.rel (0) target = $region13
    $region12: #{tpu_custom_call.1} parent=1 // pred_region
      _
    $region13: #{tpu_custom_call.1} parent=1 // pred_fallthru
      _
    // Predicated region
    $region14: #{tpu_custom_call.1} parent=1 // pred_check
      _
    $region15: #{tpu_custom_call.1} parent=1 // pred_check_branch
      %43 = sbr.rel (0) target = $region17
    $region16: #{tpu_custom_call.1} parent=1 // pred_region
      %45 = vsyncadd [#allocation6], 0
      %s46 = sshll.u32 %s3, 4
      %s47 = int_to_ptr.hbm [resolvable:$true] %s46
      %s48 = sshll.u32 [#allocation7], 4
      %s49 = int_to_ptr.vmem [resolvable:$true] %s48
      %54 = dma.hbm_to_vmem [thread:$0]  %s47, 1024, %s49, [#allocation6], 64, 64, 4
    $region17: #{tpu_custom_call.1} parent=1 // pred_fallthru
      _
    // Predicated region
    $region18: #{tpu_custom_call.1} parent=1 // pred_check
      _
    $region19: #{tpu_custom_call.1} parent=1 // pred_check_branch
      %56 = sbr.rel (0) target = $region21
    $region20: #{tpu_custom_call.1} parent=1 // pred_region
      _
    $region21: #{tpu_custom_call.1} parent=1 // pred_fallthru
      _
    // Predicated region
    $region22: #{tpu_custom_call.1} parent=1 // pred_check
      _
    $region23: #{tpu_custom_call.1} parent=1 // pred_check_branch
      %58 = sbr.rel (0) target = $region25
    $region24: #{tpu_custom_call.1} parent=1 // pred_region
      %60 = vsyncadd [#allocation9], 0
      %s61 = sshll.u32 %s5, 4
      %s62 = int_to_ptr.hbm [resolvable:$true] %s61
      %s63 = sshll.u32 [#allocation8], 4
      %s64 = int_to_ptr.vmem [resolvable:$true] %s63
      %69 = dma.hbm_to_vmem [thread:$0]  %s62, 1024, %s64, [#allocation9], 64, 64, 4
    $region25: #{tpu_custom_call.1} parent=1 // pred_fallthru
      _
    // Predicated region
    $region26: #{tpu_custom_call.1} parent=1 // pred_check
      _
    $region27: #{tpu_custom_call.1} parent=1 // pred_check_branch
      %71 = sbr.rel (0) target = $region29
    $region28: #{tpu_custom_call.1} parent=1 // pred_region
      _
    $region29: #{tpu_custom_call.1} parent=1 // pred_fallthru
      _
    // Predicated region
    $region30: #{tpu_custom_call.1} parent=1 // pred_check
      _
    $region31: #{tpu_custom_call.1} parent=1 // pred_check_branch
      %73 = sbr.rel (0) target = $region33
    $region32: #{tpu_custom_call.1} parent=1 // pred_region
      %75 = dma.done [#allocation3], 128
    $region33: #{tpu_custom_call.1} parent=1 // pred_fallthru
      _
    // Predicated region
    $region34: #{tpu_custom_call.1} parent=1 // pred_check
      _
    $region35: #{tpu_custom_call.1} parent=1 // pred_check_branch
      %77 = sbr.rel (0) target = $region37
    $region36: #{tpu_custom_call.1} parent=1 // pred_region
      %79 = dma.done [#allocation6], 1024
    $region37: #{tpu_custom_call.1} parent=1 // pred_fallthru
      _
    // Predicated region
    $region38: #{tpu_custom_call.1} parent=1 // pred_check
      _
    $region39: #{tpu_custom_call.1} parent=1 // pred_check_branch
      %81 = sbr.rel (0) target = $region41
    $region40: #{tpu_custom_call.1} parent=1 // pred_region
      %83 = dma.done [#allocation6], 1024
    $region41: #{tpu_custom_call.1} parent=1 // pred_fallthru
      _
    // Predicated region
    $region42: #{tpu_custom_call.1} parent=1 // pred_check
      _
    $region43: #{tpu_custom_call.1} parent=1 // pred_check_branch
      %85 = sbr.rel (0) target = $region45
    $region44: #{tpu_custom_call.1} parent=1 // pred_region
      %87 = dma.done [#allocation9], 1024
    $region45: #{tpu_custom_call.1} parent=1 // pred_fallthru
      _
    %v88 = vld [vmem:[#allocation2] sm:$0xff]
    %v89 = vpack.c.bf16 %v88, %v88
    %v90 = vld [vmem:[#allocation5] sm:$0xf]
    %v91 = vld [vmem:[#allocation5 + $0x4] sm:$0xf]
    %v92 = vld [vmem:[#allocation5 + $0x8] sm:$0xf]
    %v93 = vld [vmem:[#allocation5 + $0xc] sm:$0xf]
    %v94 = vld [vmem:[#allocation5 + $0x10] sm:$0xf]
    %v95 = vld [vmem:[#allocation5 + $0x14] sm:$0xf]
    %v96 = vld [vmem:[#allocation5 + $0x18] sm:$0xf]
    %v97 = vld [vmem:[#allocation5 + $0x1c] sm:$0xf]
    %v98 = vld [vmem:[#allocation5 + $0x20] sm:$0xf]
    %v99 = vld [vmem:[#allocation5 + $0x24] sm:$0xf]
    %v100 = vld [vmem:[#allocation5 + $0x28] sm:$0xf]
    %v101 = vld [vmem:[#allocation5 + $0x2c] sm:$0xf]
    %v102 = vld [vmem:[#allocation5 + $0x30] sm:$0xf]
    %v103 = vld [vmem:[#allocation5 + $0x34] sm:$0xf]
    %v104 = vld [vmem:[#allocation5 + $0x38] sm:$0xf]
    %v105 = vld [vmem:[#allocation5 + $0x3c] sm:$0xf]
    %v106 = vld [vmem:[%s2] sm:$0x1]
    %v108 = vperm.slane %v106, 0
    %v126 = vunpack.c.l.b16 %v90
    %v127 = vunpack.c.l.b16 %v91
    %v128 = vunpack.c.l.b16 %v92
    %v129 = vunpack.c.l.b16 %v93
    %v130 = vunpack.c.l.b16 %v94
    %v131 = vunpack.c.l.b16 %v95
    %v132 = vunpack.c.l.b16 %v96
    %v133 = vunpack.c.l.b16 %v97
    %v134 = vunpack.c.l.b16 %v98
    %v135 = vunpack.c.l.b16 %v99
    %v136 = vunpack.c.l.b16 %v100
    %v137 = vunpack.c.l.b16 %v101
    %v138 = vunpack.c.l.b16 %v102
    %v139 = vunpack.c.l.b16 %v103
    %v140 = vunpack.c.l.b16 %v104
    %v141 = vunpack.c.l.b16 %v105
    %v142 = vpack.c.b16 %v127, %v126
    %v143 = vpack.c.b16 %v129, %v128
    %v144 = vpack.c.b16 %v131, %v130
    %v145 = vpack.c.b16 %v133, %v132
    %v146 = vpack.c.b16 %v135, %v134
    %v147 = vpack.c.b16 %v137, %v136
    %v148 = vpack.c.b16 %v139, %v138
    %v149 = vpack.c.b16 %v141, %v140
    %158 = vmatpush.bf16.msra.mxu0 %v149
    %159 = vmatpush.bf16.msra.mxu0 %v148
    %160 = vmatpush.bf16.msra.mxu0 %v147
    %161 = vmatpush.bf16.msra.mxu0 %v146
    %162 = vmatpush.bf16.msra.mxu0 %v145
    %163 = vmatpush.bf16.msra.mxu0 %v144
    %164 = vmatpush.bf16.msra.mxu0 %v143
    %165 = vmatpush.bf16.msra.mxu0 %v142
    %166 = vmatmul.bf16.gmra.mxu0 %v89
    %v167 = vpop.f32.mrf.mxu0
    %v168 = vadd.f32 %v108, %v167
    %v169 = vpop.f32.mrf.mxu0
    %170 = vdwg.mxu0
    %v171 = vtanh.pop %v168
    %v172 = vpack.c.bf16 %v171, %v171
    %v173 = vld [vmem:[#allocation7] sm:$0xf]
    %v174 = vld [vmem:[#allocation7 + $0x4] sm:$0xf]
    %v175 = vld [vmem:[#allocation7 + $0x8] sm:$0xf]
    %v176 = vld [vmem:[#allocation7 + $0xc] sm:$0xf]
    %v177 = vld [vmem:[#allocation7 + $0x10] sm:$0xf]
    %v178 = vld [vmem:[#allocation7 + $0x14] sm:$0xf]
    %v179 = vld [vmem:[#allocation7 + $0x18] sm:$0xf]
    %v180 = vld [vmem:[#allocation7 + $0x1c] sm:$0xf]
    %v181 = vld [vmem:[#allocation7 + $0x20] sm:$0xf]
    %v182 = vld [vmem:[#allocation7 + $0x24] sm:$0xf]
    %v183 = vld [vmem:[#allocation7 + $0x28] sm:$0xf]
    %v184 = vld [vmem:[#allocation7 + $0x2c] sm:$0xf]
    %v185 = vld [vmem:[#allocation7 + $0x30] sm:$0xf]
    %v186 = vld [vmem:[#allocation7 + $0x34] sm:$0xf]
    %v187 = vld [vmem:[#allocation7 + $0x38] sm:$0xf]
    %v188 = vld [vmem:[#allocation7 + $0x3c] sm:$0xf]
    %v189 = vld [vmem:[%s4] sm:$0x1]
    %v191 = vperm.slane %v189, 0
    %v209 = vunpack.c.l.b16 %v173
    %v210 = vunpack.c.l.b16 %v174
    %v211 = vunpack.c.l.b16 %v175
    %v212 = vunpack.c.l.b16 %v176
    %v213 = vunpack.c.l.b16 %v177
    %v214 = vunpack.c.l.b16 %v178
    %v215 = vunpack.c.l.b16 %v179
    %v216 = vunpack.c.l.b16 %v180
    %v217 = vunpack.c.l.b16 %v181
    %v218 = vunpack.c.l.b16 %v182
    %v219 = vunpack.c.l.b16 %v183
    %v220 = vunpack.c.l.b16 %v184
    %v221 = vunpack.c.l.b16 %v185
    %v222 = vunpack.c.l.b16 %v186
    %v223 = vunpack.c.l.b16 %v187
    %v224 = vunpack.c.l.b16 %v188
    %v225 = vpack.c.b16 %v210, %v209
    %v226 = vpack.c.b16 %v212, %v211
    %v227 = vpack.c.b16 %v214, %v213
    %v228 = vpack.c.b16 %v216, %v215
    %v229 = vpack.c.b16 %v218, %v217
    %v230 = vpack.c.b16 %v220, %v219
    %v231 = vpack.c.b16 %v222, %v221
    %v232 = vpack.c.b16 %v224, %v223
    %241 = vmatpush.bf16.msra.mxu0 %v232
    %242 = vmatpush.bf16.msra.mxu0 %v231
    %243 = vmatpush.bf16.msra.mxu0 %v230
    %244 = vmatpush.bf16.msra.mxu0 %v229
    %245 = vmatpush.bf16.msra.mxu0 %v228
    %246 = vmatpush.bf16.msra.mxu0 %v227
    %247 = vmatpush.bf16.msra.mxu0 %v226
    %248 = vmatpush.bf16.msra.mxu0 %v225
    %249 = vmatmul.bf16.gmra.mxu0 %v172
    %v250 = vpop.f32.mrf.mxu0
    %v251 = vadd.f32 %v191, %v250
    %v252 = vpop.f32.mrf.mxu0
    %253 = vdwg.mxu0
    %v254 = vtanh.pop %v251
    %v255 = vpack.c.bf16 %v254, %v254
    %v256 = vld [vmem:[#allocation8] sm:$0xf]
    %v257 = vld [vmem:[#allocation8 + $0x4] sm:$0xf]
    %v258 = vld [vmem:[#allocation8 + $0x8] sm:$0xf]
    %v259 = vld [vmem:[#allocation8 + $0xc] sm:$0xf]
    %v260 = vld [vmem:[#allocation8 + $0x10] sm:$0xf]
    %v261 = vld [vmem:[#allocation8 + $0x14] sm:$0xf]
    %v262 = vld [vmem:[#allocation8 + $0x18] sm:$0xf]
    %v263 = vld [vmem:[#allocation8 + $0x1c] sm:$0xf]
    %v264 = vld [vmem:[#allocation8 + $0x20] sm:$0xf]
    %v265 = vld [vmem:[#allocation8 + $0x24] sm:$0xf]
    %v266 = vld [vmem:[#allocation8 + $0x28] sm:$0xf]
    %v267 = vld [vmem:[#allocation8 + $0x2c] sm:$0xf]
    %v268 = vld [vmem:[#allocation8 + $0x30] sm:$0xf]
    %v269 = vld [vmem:[#allocation8 + $0x34] sm:$0xf]
    %v270 = vld [vmem:[#allocation8 + $0x38] sm:$0xf]
    %v271 = vld [vmem:[#allocation8 + $0x3c] sm:$0xf]
    %v272 = vld [vmem:[%s6] sm:$0x1]
    %v274 = vperm.slane %v272, 0
    %v292 = vunpack.c.l.b16 %v256
    %v293 = vunpack.c.l.b16 %v257
    %v294 = vunpack.c.l.b16 %v258
    %v295 = vunpack.c.l.b16 %v259
    %v296 = vunpack.c.l.b16 %v260
    %v297 = vunpack.c.l.b16 %v261
    %v298 = vunpack.c.l.b16 %v262
    %v299 = vunpack.c.l.b16 %v263
    %v300 = vunpack.c.l.b16 %v264
    %v301 = vunpack.c.l.b16 %v265
    %v302 = vunpack.c.l.b16 %v266
    %v303 = vunpack.c.l.b16 %v267
    %v304 = vunpack.c.l.b16 %v268
    %v305 = vunpack.c.l.b16 %v269
    %v306 = vunpack.c.l.b16 %v270
    %v307 = vunpack.c.l.b16 %v271
    %v308 = vpack.c.b16 %v293, %v292
    %v309 = vpack.c.b16 %v295, %v294
    %v310 = vpack.c.b16 %v297, %v296
    %v311 = vpack.c.b16 %v299, %v298
    %v312 = vpack.c.b16 %v301, %v300
    %v313 = vpack.c.b16 %v303, %v302
    %v314 = vpack.c.b16 %v305, %v304
    %v315 = vpack.c.b16 %v307, %v306
    %324 = vmatpush.bf16.msra.mxu0 %v315
    %325 = vmatpush.bf16.msra.mxu0 %v314
    %326 = vmatpush.bf16.msra.mxu0 %v313
    %327 = vmatpush.bf16.msra.mxu0 %v312
    %328 = vmatpush.bf16.msra.mxu0 %v311
    %329 = vmatpush.bf16.msra.mxu0 %v310
    %330 = vmatpush.bf16.msra.mxu0 %v309
    %331 = vmatpush.bf16.msra.mxu0 %v308
    %332 = vmatmul.bf16.gmra.mxu0 %v255
    %v333 = vpop.f32.mrf.mxu0
    %v334 = vadd.f32 %v274, %v333
    %v335 = vpop.f32.mrf.mxu0
    %336 = vdwg.mxu0
    %v337 = vtanh.pop %v334
    %338 = vst [vmem:[#allocation10] sm:$0xff] %v337
    // Predicated region
    $region46: #{tpu_custom_call.1} parent=1 // pred_check
      _
    $region47: #{tpu_custom_call.1} parent=1 // pred_check_branch
      %340 = sbr.rel (0) target = $region49
    $region48: #{tpu_custom_call.1} parent=1 // pred_region
      %342 = vsyncadd [#allocation4], 0
      %s344 = sshll.u32 [#allocation10], 4
      %s345 = int_to_ptr.vmem [resolvable:$true] %s344
      %s346 = sshll.u32 %s7, 4
      %s347 = int_to_ptr.hbm [resolvable:$true] %s346
      %349 = dma.vmem_to_hbm [thread:$0]  %s345, 128, %s347, [#allocation4]
    $region49: #{tpu_custom_call.1} parent=1 // pred_fallthru
      _
    // Predicated region
    $region50: #{tpu_custom_call.1} parent=1 // pred_check
      _
    $region51: #{tpu_custom_call.1} parent=1 // pred_check_branch
      %351 = sbr.rel (0) target = $region53
    $region52: #{tpu_custom_call.1} parent=1 // pred_region
      %353 = dma.done [#allocation4], 128
    $region53: #{tpu_custom_call.1} parent=1 // pred_fallthru
      _
    %354 = vsyncpa [#allocation3], 1
    %355 = vsyncpa [#allocation6], 1
    %356 = vsyncpa [#allocation9], 1
    %357 = vsyncpa [#allocation4], 1

// kernel: tpu_custom_call.1
$region0: #{tpu_custom_call.1}
  #allocation0 [shape = 'u32[]', space=smem, size = 0x4, offset = 0x4, fixed_abs, tag = 'smem constant byte address 0x4 - core index']
  #allocation1 [shape = 'u32[72,128]{1,0:T(1,128)}', space=vmem, size = 0x9000, scoped, tag = 'internal scratch']
  %s0 = inlined_call_operand.hbm [shape: f32[8,128], index: 0, kind: input, shape index: {}]
  %s1 = inlined_call_operand.hbm [shape: bf16[128,128], index: 1, kind: input, shape index: {}]
  %s2 = inlined_call_operand.vmem [shape: f32[1,128], index: 2, kind: input, shape index: {}]
  %s3 = inlined_call_operand.hbm [shape: bf16[128,128], index: 3, kind: input, shape index: {}]
  %s4 = inlined_call_operand.vmem [shape: f32[1,128], index: 4, kind: input, shape index: {}]
  %s5 = inlined_call_operand.hbm [shape: bf16[128,128], index: 5, kind: input, shape index: {}]
  %s6 = inlined_call_operand.vmem [shape: f32[1,128], index: 6, kind: input, shape index: {}]
  %s7 = inlined_call_operand.hbm [shape: f32[8,128], index: 7, kind: output, shape index: {}]
  %s8 = sld [smem:[#allocation0]]
  $region54: #{tpu_custom_call.1} parent=0
    _
  %s10 = ssub.s32 1, %s8
  %s11 = scalar_select 0, %s10, %s8
  $region1: #{tpu_custom_call.1} parent=0
    #allocation2 [shape = 'u8[4096]{0}', space=vmem, size = 0x1000, scoped, tag = 'input window, operand 0, single buffered']
    #allocation3 [shape = 's32[1]{0}', space=sflag, size = 0x4, scoped, tag = 'scoped memory for tpu_custom_call.1']
    #allocation4 [shape = 's32[1]{0}', space=sflag, size = 0x4, scoped, tag = 'scoped memory for tpu_custom_call.1']
    #allocation5 [shape = 'u8[32768]{0}', space=vmem, size = 0x8000, scoped, tag = 'input window, operand 1, single buffered']
    #allocation6 [shape = 's32[1]{0}', space=sflag, size = 0x4, scoped, tag = 'scoped memory for tpu_custom_call.1']
    #allocation7 [shape = 'u8[32768]{0}', space=vmem, size = 0x8000, scoped, tag = 'input window, operand 3, single buffered']
    #allocation8 [shape = 'u8[32768]{0}', space=vmem, size = 0x8000, scoped, tag = 'input window, operand 5, single buffered']
    #allocation9 [shape = 's32[1]{0}', space=sflag, size = 0x4, scoped, tag = 'scoped memory for tpu_custom_call.1']
    #allocation10 [shape = 'u8[4096]{0}', space=vmem, size = 0x1000, scoped, tag = 'output window, operand 0, single buffered']
    %12 = vsyncpa [#allocation3], 0
    %13 = vsyncpa [#allocation6], 0
    %14 = vsyncpa [#allocation9], 0
    %15 = vsyncpa [#allocation4], 0
    // Predicated region
    $region2: #{tpu_custom_call.1} parent=1 // pred_check
      _
    $region3: #{tpu_custom_call.1} parent=1 // pred_check_branch
      %17 = sbr.rel (0) target = $region5
    $region4: #{tpu_custom_call.1} parent=1 // pred_region
      %19 = vsyncadd [#allocation3], 0
      %s21 = sshll.u32 %s0, 4
      %s22 = int_to_ptr.hbm [resolvable:$true] %s21
      %s23 = sshll.u32 [#allocation2], 4
      %s24 = int_to_ptr.vmem [resolvable:$true] %s23
      %26 = dma.hbm_to_vmem [thread:$0]  %s22, 128, %s24, [#allocation3]
    $region5: #{tpu_custom_call.1} parent=1 // pred_fallthru
      _
    // Predicated region
    $region6: #{tpu_custom_call.1} parent=1 // pred_check
      _
    $region7: #{tpu_custom_call.1} parent=1 // pred_check_branch
      %28 = sbr.rel (0) target = $region9
    $region8: #{tpu_custom_call.1} parent=1 // pred_region
      %30 = vsyncadd [#allocation6], 0
      %s31 = sshll.u32 %s1, 4
      %s32 = int_to_ptr.hbm [resolvable:$true] %s31
      %s33 = sshll.u32 [#allocation5], 4
      %s34 = int_to_ptr.vmem [resolvable:$true] %s33
      %39 = dma.hbm_to_vmem [thread:$0]  %s32, 1024, %s34, [#allocation6], 64, 64, 4
    $region9: #{tpu_custom_call.1} parent=1 // pred_fallthru
      _
    // Predicated region
    $region10: #{tpu_custom_call.1} parent=1 // pred_check
      _
    $region11: #{tpu_custom_call.1} parent=1 // pred_check_branch
      %41 = sbr.rel (0) target = $region13
    $region12: #{tpu_custom_call.1} parent=1 // pred_region
      _
    $region13: #{tpu_custom_call.1} parent=1 // pred_fallthru
      _
    // Predicated region
    $region14: #{tpu_custom_call.1} parent=1 // pred_check
      _
    $region15: #{tpu_custom_call.1} parent=1 // pred_check_branch
      %43 = sbr.rel (0) target = $region17
    $region16: #{tpu_custom_call.1} parent=1 // pred_region
      %45 = vsyncadd [#allocation6], 0
      %s46 = sshll.u32 %s3, 4
      %s47 = int_to_ptr.hbm [resolvable:$true] %s46
      %s48 = sshll.u32 [#allocation7], 4
      %s49 = int_to_ptr.vmem [resolvable:$true] %s48
      %54 = dma.hbm_to_vmem [thread:$0]  %s47, 1024, %s49, [#allocation6], 64, 64, 4
    $region17: #{tpu_custom_call.1} parent=1 // pred_fallthru
      _
    // Predicated region
    $region18: #{tpu_custom_call.1} parent=1 // pred_check
      _
    $region19: #{tpu_custom_call.1} parent=1 // pred_check_branch
      %56 = sbr.rel (0) target = $region21
    $region20: #{tpu_custom_call.1} parent=1 // pred_region
      _
    $region21: #{tpu_custom_call.1} parent=1 // pred_fallthru
      _
    // Predicated region
    $region22: #{tpu_custom_call.1} parent=1 // pred_check
      _
    $region23: #{tpu_custom_call.1} parent=1 // pred_check_branch
      %58 = sbr.rel (0) target = $region25
    $region24: #{tpu_custom_call.1} parent=1 // pred_region
      %60 = vsyncadd [#allocation9], 0
      %s61 = sshll.u32 %s5, 4
      %s62 = int_to_ptr.hbm [resolvable:$true] %s61
      %s63 = sshll.u32 [#allocation8], 4
      %s64 = int_to_ptr.vmem [resolvable:$true] %s63
      %69 = dma.hbm_to_vmem [thread:$0]  %s62, 1024, %s64, [#allocation9], 64, 64, 4
    $region25: #{tpu_custom_call.1} parent=1 // pred_fallthru
      _
    // Predicated region
    $region26: #{tpu_custom_call.1} parent=1 // pred_check
      _
    $region27: #{tpu_custom_call.1} parent=1 // pred_check_branch
      %71 = sbr.rel (0) target = $region29
    $region28: #{tpu_custom_call.1} parent=1 // pred_region
      _
    $region29: #{tpu_custom_call.1} parent=1 // pred_fallthru
      _
    // Predicated region
    $region30: #{tpu_custom_call.1} parent=1 // pred_check
      _
    $region31: #{tpu_custom_call.1} parent=1 // pred_check_branch
      %73 = sbr.rel (0) target = $region33
    $region32: #{tpu_custom_call.1} parent=1 // pred_region
      %75 = dma.done [#allocation3], 128
    $region33: #{tpu_custom_call.1} parent=1 // pred_fallthru
      _
    // Predicated region
    $region34: #{tpu_custom_call.1} parent=1 // pred_check
      _
    $region35: #{tpu_custom_call.1} parent=1 // pred_check_branch
      %77 = sbr.rel (0) target = $region37
    $region36: #{tpu_custom_call.1} parent=1 // pred_region
      %79 = dma.done [#allocation6], 1024
    $region37: #{tpu_custom_call.1} parent=1 // pred_fallthru
      _
    // Predicated region
    $region38: #{tpu_custom_call.1} parent=1 // pred_check
      _
    $region39: #{tpu_custom_call.1} parent=1 // pred_check_branch
      %81 = sbr.rel (0) target = $region41
    $region40: #{tpu_custom_call.1} parent=1 // pred_region
      %83 = dma.done [#allocation6], 1024
    $region41: #{tpu_custom_call.1} parent=1 // pred_fallthru
      _
    // Predicated region
    $region42: #{tpu_custom_call.1} parent=1 // pred_check
      _
    $region43: #{tpu_custom_call.1} parent=1 // pred_check_branch
      %85 = sbr.rel (0) target = $region45
    $region44: #{tpu_custom_call.1} parent=1 // pred_region
      %87 = dma.done [#allocation9], 1024
    $region45: #{tpu_custom_call.1} parent=1 // pred_fallthru
      _
    %v88 = vld [vmem:[#allocation2] sm:$0xff]
    %v89 = vpack.c.bf16 %v88, %v88
    %v90 = vld [vmem:[#allocation5] sm:$0xf]
    %v91 = vld [vmem:[#allocation5 + $0x4] sm:$0xf]
    %v92 = vld [vmem:[#allocation5 + $0x8] sm:$0xf]
    %v93 = vld [vmem:[#allocation5 + $0xc] sm:$0xf]
    %v94 = vld [vmem:[#allocation5 + $0x10] sm:$0xf]
    %v95 = vld [vmem:[#allocation5 + $0x14] sm:$0xf]
    %v96 = vld [vmem:[#allocation5 + $0x18] sm:$0xf]
    %v97 = vld [vmem:[#allocation5 + $0x1c] sm:$0xf]
    %v98 = vld [vmem:[#allocation5 + $0x20] sm:$0xf]
    %v99 = vld [vmem:[#allocation5 + $0x24] sm:$0xf]
    %v100 = vld [vmem:[#allocation5 + $0x28] sm:$0xf]
    %v101 = vld [vmem:[#allocation5 + $0x2c] sm:$0xf]
    %v102 = vld [vmem:[#allocation5 + $0x30] sm:$0xf]
    %v103 = vld [vmem:[#allocation5 + $0x34] sm:$0xf]
    %v104 = vld [vmem:[#allocation5 + $0x38] sm:$0xf]
    %v105 = vld [vmem:[#allocation5 + $0x3c] sm:$0xf]
    %v106 = vld [vmem:[%s2] sm:$0x1]
    %v108 = vperm.slane %v106, 0
    %v126 = vunpack.c.l.b16 %v90
    %v127 = vunpack.c.l.b16 %v91
    %v128 = vunpack.c.l.b16 %v92
    %v129 = vunpack.c.l.b16 %v93
    %v130 = vunpack.c.l.b16 %v94
    %v131 = vunpack.c.l.b16 %v95
    %v132 = vunpack.c.l.b16 %v96
    %v133 = vunpack.c.l.b16 %v97
    %v134 = vunpack.c.l.b16 %v98
    %v135 = vunpack.c.l.b16 %v99
    %v136 = vunpack.c.l.b16 %v100
    %v137 = vunpack.c.l.b16 %v101
    %v138 = vunpack.c.l.b16 %v102
    %v139 = vunpack.c.l.b16 %v103
    %v140 = vunpack.c.l.b16 %v104
    %v141 = vunpack.c.l.b16 %v105
    %v142 = vpack.c.b16 %v127, %v126
    %v143 = vpack.c.b16 %v129, %v128
    %v144 = vpack.c.b16 %v131, %v130
    %v145 = vpack.c.b16 %v133, %v132
    %v146 = vpack.c.b16 %v135, %v134
    %v147 = vpack.c.b16 %v137, %v136
    %v148 = vpack.c.b16 %v139, %v138
    %v149 = vpack.c.b16 %v141, %v140
    %158 = vmatpush.bf16.msra.mxu0 %v149
    %159 = vmatpush.bf16.msra.mxu0 %v148
    %160 = vmatpush.bf16.msra.mxu0 %v147
    %161 = vmatpush.bf16.msra.mxu0 %v146
    %162 = vmatpush.bf16.msra.mxu0 %v145
    %163 = vmatpush.bf16.msra.mxu0 %v144
    %164 = vmatpush.bf16.msra.mxu0 %v143
    %165 = vmatpush.bf16.msra.mxu0 %v142
    %166 = vmatmul.bf16.gmra.mxu0 %v89
    %v167 = vpop.f32.mrf.mxu0
    %v168 = vadd.f32 %v108, %v167
    %v169 = vpop.f32.mrf.mxu0
    %170 = vdwg.mxu0
    %v171 = vtanh.pop %v168
    %v172 = vpack.c.bf16 %v171, %v171
    %v173 = vld [vmem:[#allocation7] sm:$0xf]
    %v174 = vld [vmem:[#allocation7 + $0x4] sm:$0xf]
    %v175 = vld [vmem:[#allocation7 + $0x8] sm:$0xf]
    %v176 = vld [vmem:[#allocation7 + $0xc] sm:$0xf]
    %v177 = vld [vmem:[#allocation7 + $0x10] sm:$0xf]
    %v178 = vld [vmem:[#allocation7 + $0x14] sm:$0xf]
    %v179 = vld [vmem:[#allocation7 + $0x18] sm:$0xf]
    %v180 = vld [vmem:[#allocation7 + $0x1c] sm:$0xf]
    %v181 = vld [vmem:[#allocation7 + $0x20] sm:$0xf]
    %v182 = vld [vmem:[#allocation7 + $0x24] sm:$0xf]
    %v183 = vld [vmem:[#allocation7 + $0x28] sm:$0xf]
    %v184 = vld [vmem:[#allocation7 + $0x2c] sm:$0xf]
    %v185 = vld [vmem:[#allocation7 + $0x30] sm:$0xf]
    %v186 = vld [vmem:[#allocation7 + $0x34] sm:$0xf]
    %v187 = vld [vmem:[#allocation7 + $0x38] sm:$0xf]
    %v188 = vld [vmem:[#allocation7 + $0x3c] sm:$0xf]
    %v189 = vld [vmem:[%s4] sm:$0x1]
    %v191 = vperm.slane %v189, 0
    %v209 = vunpack.c.l.b16 %v173
    %v210 = vunpack.c.l.b16 %v174
    %v211 = vunpack.c.l.b16 %v175
    %v212 = vunpack.c.l.b16 %v176
    %v213 = vunpack.c.l.b16 %v177
    %v214 = vunpack.c.l.b16 %v178
    %v215 = vunpack.c.l.b16 %v179
    %v216 = vunpack.c.l.b16 %v180
    %v217 = vunpack.c.l.b16 %v181
    %v218 = vunpack.c.l.b16 %v182
    %v219 = vunpack.c.l.b16 %v183
    %v220 = vunpack.c.l.b16 %v184
    %v221 = vunpack.c.l.b16 %v185
    %v222 = vunpack.c.l.b16 %v186
    %v223 = vunpack.c.l.b16 %v187
    %v224 = vunpack.c.l.b16 %v188
    %v225 = vpack.c.b16 %v210, %v209
    %v226 = vpack.c.b16 %v212, %v211
    %v227 = vpack.c.b16 %v214, %v213
    %v228 = vpack.c.b16 %v216, %v215
    %v229 = vpack.c.b16 %v218, %v217
    %v230 = vpack.c.b16 %v220, %v219
    %v231 = vpack.c.b16 %v222, %v221
    %v232 = vpack.c.b16 %v224, %v223
    %241 = vmatpush.bf16.msra.mxu0 %v232
    %242 = vmatpush.bf16.msra.mxu0 %v231
    %243 = vmatpush.bf16.msra.mxu0 %v230
    %244 = vmatpush.bf16.msra.mxu0 %v229
    %245 = vmatpush.bf16.msra.mxu0 %v228
    %246 = vmatpush.bf16.msra.mxu0 %v227
    %247 = vmatpush.bf16.msra.mxu0 %v226
    %248 = vmatpush.bf16.msra.mxu0 %v225
    %249 = vmatmul.bf16.gmra.mxu0 %v172
    %v250 = vpop.f32.mrf.mxu0
    %v251 = vadd.f32 %v191, %v250
    %v252 = vpop.f32.mrf.mxu0
    %253 = vdwg.mxu0
    %v254 = vtanh.pop %v251
    %v255 = vpack.c.bf16 %v254, %v254
    %v256 = vld [vmem:[#allocation8] sm:$0xf]
    %v257 = vld [vmem:[#allocation8 + $0x4] sm:$0xf]
    %v258 = vld [vmem:[#allocation8 + $0x8] sm:$0xf]
    %v259 = vld [vmem:[#allocation8 + $0xc] sm:$0xf]
    %v260 = vld [vmem:[#allocation8 + $0x10] sm:$0xf]
    %v261 = vld [vmem:[#allocation8 + $0x14] sm:$0xf]
    %v262 = vld [vmem:[#allocation8 + $0x18] sm:$0xf]
    %v263 = vld [vmem:[#allocation8 + $0x1c] sm:$0xf]
    %v264 = vld [vmem:[#allocation8 + $0x20] sm:$0xf]
    %v265 = vld [vmem:[#allocation8 + $0x24] sm:$0xf]
    %v266 = vld [vmem:[#allocation8 + $0x28] sm:$0xf]
    %v267 = vld [vmem:[#allocation8 + $0x2c] sm:$0xf]
    %v268 = vld [vmem:[#allocation8 + $0x30] sm:$0xf]
    %v269 = vld [vmem:[#allocation8 + $0x34] sm:$0xf]
    %v270 = vld [vmem:[#allocation8 + $0x38] sm:$0xf]
    %v271 = vld [vmem:[#allocation8 + $0x3c] sm:$0xf]
    %v272 = vld [vmem:[%s6] sm:$0x1]
    %v274 = vperm.slane %v272, 0
    %v292 = vunpack.c.l.b16 %v256
    %v293 = vunpack.c.l.b16 %v257
    %v294 = vunpack.c.l.b16 %v258
    %v295 = vunpack.c.l.b16 %v259
    %v296 = vunpack.c.l.b16 %v260
    %v297 = vunpack.c.l.b16 %v261
    %v298 = vunpack.c.l.b16 %v262
    %v299 = vunpack.c.l.b16 %v263
    %v300 = vunpack.c.l.b16 %v264
    %v301 = vunpack.c.l.b16 %v265
    %v302 = vunpack.c.l.b16 %v266
    %v303 = vunpack.c.l.b16 %v267
    %v304 = vunpack.c.l.b16 %v268
    %v305 = vunpack.c.l.b16 %v269
    %v306 = vunpack.c.l.b16 %v270
    %v307 = vunpack.c.l.b16 %v271
    %v308 = vpack.c.b16 %v293, %v292
    %v309 = vpack.c.b16 %v295, %v294
    %v310 = vpack.c.b16 %v297, %v296
    %v311 = vpack.c.b16 %v299, %v298
    %v312 = vpack.c.b16 %v301, %v300
    %v313 = vpack.c.b16 %v303, %v302
    %v314 = vpack.c.b16 %v305, %v304
    %v315 = vpack.c.b16 %v307, %v306
    %324 = vmatpush.bf16.msra.mxu0 %v315
    %325 = vmatpush.bf16.msra.mxu0 %v314
    %326 = vmatpush.bf16.msra.mxu0 %v313
    %327 = vmatpush.bf16.msra.mxu0 %v312
    %328 = vmatpush.bf16.msra.mxu0 %v311
    %329 = vmatpush.bf16.msra.mxu0 %v310
    %330 = vmatpush.bf16.msra.mxu0 %v309
    %331 = vmatpush.bf16.msra.mxu0 %v308
    %332 = vmatmul.bf16.gmra.mxu0 %v255
    %v333 = vpop.f32.mrf.mxu0
    %v334 = vadd.f32 %v274, %v333
    %v335 = vpop.f32.mrf.mxu0
    %336 = vdwg.mxu0
    %v337 = vtanh.pop %v334
    %338 = vst [vmem:[#allocation10] sm:$0xff] %v337
    // Predicated region
    $region46: #{tpu_custom_call.1} parent=1 // pred_check
      _
    $region47: #{tpu_custom_call.1} parent=1 // pred_check_branch
      %340 = sbr.rel (0) target = $region49
    $region48: #{tpu_custom_call.1} parent=1 // pred_region
      %342 = vsyncadd [#allocation4], 0
      %s344 = sshll.u32 [#allocation10], 4
      %s345 = int_to_ptr.vmem [resolvable:$true] %s344
      %s346 = sshll.u32 %s7, 4
      %s347 = int_to_ptr.hbm [resolvable:$true] %s346
      %349 = dma.vmem_to_hbm [thread:$0]  %s345, 128, %s347, [#allocation4]
    $region49: #{tpu_custom_call.1} parent=1 // pred_fallthru
      _
    // Predicated region
    $region50: #{tpu_custom_call.1} parent=1 // pred_check
      _
    $region51: #{tpu_custom_call.1} parent=1 // pred_check_branch
      %351 = sbr.rel (0) target = $region53
    $region52: #{tpu_custom_call.1} parent=1 // pred_region
      %353 = dma.done [#allocation4], 128
    $region53: #{tpu_custom_call.1} parent=1 // pred_fallthru
      _
    %354 = vsyncpa [#allocation3], 1
    %355 = vsyncpa [#allocation6], 1
    %356 = vsyncpa [#allocation9], 1
    %357 = vsyncpa [#allocation4], 1

</llo_original>
